<compile_context>
chip_gen: v7x
topology: tpu7x:2x2x1
jax: 0.10.0
libtpu: 0.0.40
codegen_flags: <defaults>
</compile_context>

<pallas_src>
import functools

import jax
import jax.numpy as jnp
from jax.experimental import pallas as pl
from jax.experimental.pallas import tpu as pltpu


# ------------------------- fused multi-head attention kernel -------------------------
def _mha_kernel(x_ref, w_in_ref, b_in_ref, w_out_ref, b_out_ref, o_ref, *, num_heads):
    """Fused MHA over the (tiny, static) leading seq axis, tokens on the lane axis.

    x_ref    : (L, C, Nb)   input tile, Nb tokens on lanes
    w_in_ref : (3C, C)      packed q/k/v projection (torch in_proj_weight)
    b_in_ref : (3C, 1)
    w_out_ref: (C, C)       out_proj.weight
    b_out_ref: (C, 1)
    o_ref    : (L, C, Nb)
    """
    L, C, Nb = x_ref.shape
    hd = C // num_heads
    scale = float(hd) ** -0.5

    w_in = w_in_ref[...].astype(jnp.float32)
    b_in = b_in_ref[...].astype(jnp.float32)
    w_out = w_out_ref[...].astype(jnp.float32)
    b_out = b_out_ref[...].astype(jnp.float32)

    # ---- packed q/k/v in-projection for ALL L seq positions in one MXU dot ----
    # tokens of every seq position are concatenated along the lane axis (lane-aligned
    # 128-wide groups), so the later per-position slices are free lane-group selects.
    x_all = jnp.concatenate([x_ref[l].astype(jnp.float32) for l in range(L)],
                            axis=-1)                                          # (C, L*Nb)
    qkv = jnp.dot(w_in, x_all, preferred_element_type=jnp.float32) + b_in     # (3C, L*Nb)

    def lane(t, l):  # lane-aligned slice holding seq position l
        return t[:, l * Nb:(l + 1) * Nb]

    q = qkv[0:C] * scale
    k = qkv[C:2 * C]
    v = qkv[2 * C:3 * C]

    # ---- attention over the tiny static L axis, vectorized along token lanes ----
    attn_cols = []
    for l in range(L):                                                        # query position
        head_outs = []
        for h in range(num_heads):
            hs = slice(h * hd, (h + 1) * hd)
            qh = lane(q, l)[hs]                                               # (hd, Nb)
            # scores against every key position: length-L softmax, lane-wise.
            s = [jnp.sum(qh * lane(k, lp)[hs], axis=0, keepdims=True)         # (1, Nb)
                 for lp in range(L)]
            m = s[0]
            for lp in range(1, L):
                m = jnp.maximum(m, s[lp])
            e = [jnp.exp(si - m) for si in s]
            denom = e[0]
            for lp in range(1, L):
                denom = denom + e[lp]
            inv = 1.0 / denom                                                 # (1, Nb)
            acc = jnp.zeros((hd, Nb), jnp.float32)
            for lp in range(L):
                acc = acc + (e[lp] * inv) * lane(v, lp)[hs]                   # (hd, Nb)
            head_outs.append(acc)
        attn_cols.append(head_outs[0] if num_heads == 1
                         else jnp.concatenate(head_outs, axis=0))             # (C, Nb)

    # ---- single out-projection MXU dot covering all L positions ----
    attn_all = jnp.concatenate(attn_cols, axis=-1)                            # (C, L*Nb)
    y_all = jnp.dot(w_out, attn_all, preferred_element_type=jnp.float32) + b_out
    for l in range(L):
        o_ref[l] = lane(y_all, l).astype(o_ref.dtype)


# ------------------------------------ wrapper ------------------------------------
def image_self_attention_forward(x_bchw, params, *, num_heads=1):
    """Numerically reproduces ImageSelfAttention.forward (torch MHA, batch_first=False)."""
    B, C, W, H = x_bchw.shape
    N = W * H
    assert C % num_heads == 0

    # PyTorch's x.reshape(b, w*h, c) is a raw row-major reshape -> (seq=b, batch=w*h, embed=c).
    x_lnc = x_bchw.reshape(B, N, C)
    # lane-dense compute layout: the w*h tokens go on the 128-wide lane axis.
    x_lcn = jnp.transpose(x_lnc, (0, 2, 1))                                   # (L, C, N)

    # tile the token axis; >=2 parallel grid points keeps both v7x TensorCores busy.
    nb = 128 if (N % 128 == 0 and N >= 256) else N
    grid = (N // nb,)

    w_in = params["in_proj_weight"]                                           # (3C, C)
    b_in = params["in_proj_bias"].reshape(3 * C, 1)
    w_out = params["out_proj_weight"]                                         # (C, C)
    b_out = params["out_proj_bias"].reshape(C, 1)

    out_lcn = pl.pallas_call(
        functools.partial(_mha_kernel, num_heads=num_heads),
        out_shape=jax.ShapeDtypeStruct((B, C, N), x_bchw.dtype),
        grid=grid,
        in_specs=[
            pl.BlockSpec((B, C, nb), lambda i: (0, 0, i)),
            pl.BlockSpec((3 * C, C), lambda i: (0, 0)),
            pl.BlockSpec((3 * C, 1), lambda i: (0, 0)),
            pl.BlockSpec((C, C), lambda i: (0, 0)),
            pl.BlockSpec((C, 1), lambda i: (0, 0)),
        ],
        out_specs=pl.BlockSpec((B, C, nb), lambda i: (0, 0, i)),
        compiler_params=pltpu.CompilerParams(dimension_semantics=("parallel",)),
    )(x_lcn, w_in, b_in, w_out, b_out)

    # back to the PyTorch layout and the module's final raw reshape.
    out_lnc = jnp.transpose(out_lcn, (0, 2, 1))                               # (L, N, C)
    return out_lnc.reshape(B, C, W, H)


# ------------------------------- pure-JAX reference -------------------------------
def reference_forward(x_bchw, params, *, num_heads=1):
    """Replica of torch.nn.MultiheadAttention forward (batch_first=False, eval mode)."""
    B, C, W, H = x_bchw.shape
    x = x_bchw.reshape(B, W * H, C)                                           # (L, N, E)
    L, N, E = x.shape
    hd = E // num_heads

    proj = x @ params["in_proj_weight"].T + params["in_proj_bias"]            # (L, N, 3E)
    q, k, v = jnp.split(proj, 3, axis=-1)

    def heads(t):                                                             # -> (N*heads, L, hd)
        return t.reshape(L, N * num_heads, hd).transpose(1, 0, 2)

    qh, kh, vh = heads(q), heads(k), heads(v)
    scores = jnp.einsum("blh,bmh->blm", qh, kh) / jnp.sqrt(jnp.float32(hd))
    wts = jax.nn.softmax(scores, axis=-1)
    o = jnp.einsum("blm,bmh->blh", wts, vh)                                   # (N*heads, L, hd)
    o = o.transpose(1, 0, 2).reshape(L, N, E)
    out = o @ params["out_proj_weight"].T + params["out_proj_bias"]
    return out.reshape(B, C, W, H)


if __name__ == "__main__":
    B, C, W, H = 2, 4, 16, 16
    num_heads = 1

    ks = jax.random.split(jax.random.PRNGKey(0), 5)
    x = jax.random.normal(ks[0], (B, C, W, H), jnp.float32)                   # NCHW, PyTorch layout
    params = {
        "in_proj_weight": 0.3 * jax.random.normal(ks[1], (3 * C, C), jnp.float32),
        "in_proj_bias": 0.1 * jax.random.normal(ks[2], (3 * C,), jnp.float32),
        "out_proj_weight": 0.3 * jax.random.normal(ks[3], (C, C), jnp.float32),
        "out_proj_bias": 0.1 * jax.random.normal(ks[4], (C,), jnp.float32),
    }

    out = jax.block_until_ready(image_self_attention_forward(x, params, num_heads=num_heads))
    ref = jax.block_until_ready(reference_forward(x, params, num_heads=num_heads))

    assert out.shape == (B, C, W, H), out.shape
    if not jnp.allclose(out, ref, rtol=1e-3, atol=1e-3):
        raise AssertionError(f"mismatch, max abs diff = {jnp.max(jnp.abs(out - ref))}")
    print("KERNEL_OK")
</pallas_src>

<mosaic_0001>
module attributes {stable_mosaic.version = 11 : i64} {
  func.func @_mha_kernel(%arg0: i32, %arg1: memref<2x4x128xf32, #tpu.memory_space<vmem>>, %arg2: memref<12x4xf32, #tpu.memory_space<vmem>>, %arg3: memref<12x1xf32, #tpu.memory_space<vmem>>, %arg4: memref<4x4xf32, #tpu.memory_space<vmem>>, %arg5: memref<4x1xf32, #tpu.memory_space<vmem>>, %arg6: memref<2x4x128xf32, #tpu.memory_space<vmem>>) attributes {dimension_semantics = [#tpu.dimension_semantics<parallel>], iteration_bounds = array<i64: 2>, scalar_prefetch = 0 : i64, scratch_operands = 0 : i64, tpu.core_type = #tpu.core_type<tc>, window_params = [{transform_indices = @transform_0, window_bounds = array<i64: 2, 4, 128>}, {pipeline_mode = #tpu.pipeline_mode<synchronous>, transform_indices = @transform_1, window_bounds = array<i64: 12, 4>}, {pipeline_mode = #tpu.pipeline_mode<synchronous>, transform_indices = @transform_2, window_bounds = array<i64: 12, 1>}, {pipeline_mode = #tpu.pipeline_mode<synchronous>, transform_indices = @transform_3, window_bounds = array<i64: 4, 4>}, {pipeline_mode = #tpu.pipeline_mode<synchronous>, transform_indices = @transform_4, window_bounds = array<i64: 4, 1>}, {transform_indices = @transform_5, window_bounds = array<i64: 2, 4, 128>}]} {
    %c0 = arith.constant 0 : index
    %c0_0 = arith.constant 0 : index
    %0 = vector.load %arg2[%c0, %c0_0] : memref<12x4xf32, #tpu.memory_space<vmem>>, vector<12x4xf32>
    %c0_1 = arith.constant 0 : index
    %c0_2 = arith.constant 0 : index
    %1 = vector.load %arg3[%c0_1, %c0_2] : memref<12x1xf32, #tpu.memory_space<vmem>>, vector<12x1xf32>
    %c0_3 = arith.constant 0 : index
    %c0_4 = arith.constant 0 : index
    %2 = vector.load %arg4[%c0_3, %c0_4] : memref<4x4xf32, #tpu.memory_space<vmem>>, vector<4x4xf32>
    %c0_5 = arith.constant 0 : index
    %c0_6 = arith.constant 0 : index
    %3 = vector.load %arg5[%c0_5, %c0_6] : memref<4x1xf32, #tpu.memory_space<vmem>>, vector<4x1xf32>
    %c0_7 = arith.constant 0 : index
    %c0_8 = arith.constant 0 : index
    %c0_9 = arith.constant 0 : index
    %4 = vector.load %arg1[%c0_7, %c0_8, %c0_9] : memref<2x4x128xf32, #tpu.memory_space<vmem>>, vector<1x4x128xf32>
    %5 = vector.shape_cast %4 : vector<1x4x128xf32> to vector<4x128xf32>
    %c1 = arith.constant 1 : index
    %c0_10 = arith.constant 0 : index
    %c0_11 = arith.constant 0 : index
    %6 = vector.load %arg1[%c1, %c0_10, %c0_11] : memref<2x4x128xf32, #tpu.memory_space<vmem>>, vector<1x4x128xf32>
    %7 = vector.shape_cast %6 : vector<1x4x128xf32> to vector<4x128xf32>
    %8 = tpu.concatenate %5, %7 in 1 : vector<4x128xf32>, vector<4x128xf32> -> vector<4x256xf32>
    %cst = arith.constant dense<0.000000e+00> : vector<12x256xf32>
    %9 = tpu.matmul %0, %8, %cst {dimension_numbers = #tpu.dot_dimension_numbers<[1], [0], [0], [1], [0, 0, 1, 1], [], []>} : vector<12x4xf32>, vector<4x256xf32>, vector<12x256xf32> -> vector<12x256xf32>
    %10 = vector.broadcast %1 : vector<12x1xf32> to vector<12x256xf32>
    %11 = arith.addf %9, %10 : vector<12x256xf32>
    %12 = vector.extract_strided_slice %11 {offsets = [0, 0], sizes = [4, 256], strides = [1, 1]} : vector<12x256xf32> to vector<4x256xf32>
    %cst_12 = arith.constant 5.000000e-01 : f32
    %13 = vector.broadcast %cst_12 : f32 to vector<4x256xf32>
    %14 = arith.mulf %12, %13 : vector<4x256xf32>
    %15 = vector.extract_strided_slice %11 {offsets = [4, 0], sizes = [4, 256], strides = [1, 1]} : vector<12x256xf32> to vector<4x256xf32>
    %16 = vector.extract_strided_slice %11 {offsets = [8, 0], sizes = [4, 256], strides = [1, 1]} : vector<12x256xf32> to vector<4x256xf32>
    %17 = vector.extract_strided_slice %14 {offsets = [0, 0], sizes = [4, 128], strides = [1, 1]} : vector<4x256xf32> to vector<4x128xf32>
    %18 = vector.extract_strided_slice %15 {offsets = [0, 0], sizes = [4, 128], strides = [1, 1]} : vector<4x256xf32> to vector<4x128xf32>
    %19 = arith.mulf %17, %18 : vector<4x128xf32>
    %cst_13 = arith.constant dense<0.000000e+00> : vector<128xf32>
    %20 = vector.multi_reduction <add>, %19, %cst_13 [0] : vector<4x128xf32> to vector<128xf32>
    %21 = vector.shape_cast %20 : vector<128xf32> to vector<1x128xf32>
    %22 = vector.extract_strided_slice %15 {offsets = [0, 128], sizes = [4, 128], strides = [1, 1]} : vector<4x256xf32> to vector<4x128xf32>
    %23 = arith.mulf %17, %22 : vector<4x128xf32>
    %cst_14 = arith.constant dense<0.000000e+00> : vector<128xf32>
    %24 = vector.multi_reduction <add>, %23, %cst_14 [0] : vector<4x128xf32> to vector<128xf32>
    %25 = vector.shape_cast %24 : vector<128xf32> to vector<1x128xf32>
    %26 = arith.maximumf %21, %25 : vector<1x128xf32>
    %27 = arith.subf %21, %26 : vector<1x128xf32>
    %28 = math.exp %27 : vector<1x128xf32>
    %29 = arith.subf %25, %26 : vector<1x128xf32>
    %30 = math.exp %29 : vector<1x128xf32>
    %31 = arith.addf %28, %30 : vector<1x128xf32>
    %cst_15 = arith.constant 1.000000e+00 : f32
    %32 = vector.broadcast %cst_15 : f32 to vector<1x128xf32>
    %33 = arith.divf %32, %31 : vector<1x128xf32>
    %cst_16 = arith.constant 0.000000e+00 : f32
    %34 = vector.broadcast %cst_16 : f32 to vector<4x128xf32>
    %35 = arith.mulf %28, %33 : vector<1x128xf32>
    %36 = vector.extract_strided_slice %16 {offsets = [0, 0], sizes = [4, 128], strides = [1, 1]} : vector<4x256xf32> to vector<4x128xf32>
    %37 = vector.broadcast %35 : vector<1x128xf32> to vector<4x128xf32>
    %38 = arith.mulf %37, %36 : vector<4x128xf32>
    %39 = arith.addf %34, %38 : vector<4x128xf32>
    %40 = arith.mulf %30, %33 : vector<1x128xf32>
    %41 = vector.extract_strided_slice %16 {offsets = [0, 128], sizes = [4, 128], strides = [1, 1]} : vector<4x256xf32> to vector<4x128xf32>
    %42 = vector.broadcast %40 : vector<1x128xf32> to vector<4x128xf32>
    %43 = arith.mulf %42, %41 : vector<4x128xf32>
    %44 = arith.addf %39, %43 : vector<4x128xf32>
    %45 = vector.extract_strided_slice %14 {offsets = [0, 128], sizes = [4, 128], strides = [1, 1]} : vector<4x256xf32> to vector<4x128xf32>
    %46 = vector.extract_strided_slice %15 {offsets = [0, 0], sizes = [4, 128], strides = [1, 1]} : vector<4x256xf32> to vector<4x128xf32>
    %47 = arith.mulf %45, %46 : vector<4x128xf32>
    %cst_17 = arith.constant dense<0.000000e+00> : vector<128xf32>
    %48 = vector.multi_reduction <add>, %47, %cst_17 [0] : vector<4x128xf32> to vector<128xf32>
    %49 = vector.shape_cast %48 : vector<128xf32> to vector<1x128xf32>
    %50 = vector.extract_strided_slice %15 {offsets = [0, 128], sizes = [4, 128], strides = [1, 1]} : vector<4x256xf32> to vector<4x128xf32>
    %51 = arith.mulf %45, %50 : vector<4x128xf32>
    %cst_18 = arith.constant dense<0.000000e+00> : vector<128xf32>
    %52 = vector.multi_reduction <add>, %51, %cst_18 [0] : vector<4x128xf32> to vector<128xf32>
    %53 = vector.shape_cast %52 : vector<128xf32> to vector<1x128xf32>
    %54 = arith.maximumf %49, %53 : vector<1x128xf32>
    %55 = arith.subf %49, %54 : vector<1x128xf32>
    %56 = math.exp %55 : vector<1x128xf32>
    %57 = arith.subf %53, %54 : vector<1x128xf32>
    %58 = math.exp %57 : vector<1x128xf32>
    %59 = arith.addf %56, %58 : vector<1x128xf32>
    %cst_19 = arith.constant 1.000000e+00 : f32
    %60 = vector.broadcast %cst_19 : f32 to vector<1x128xf32>
    %61 = arith.divf %60, %59 : vector<1x128xf32>
    %cst_20 = arith.constant 0.000000e+00 : f32
    %62 = vector.broadcast %cst_20 : f32 to vector<4x128xf32>
    %63 = arith.mulf %56, %61 : vector<1x128xf32>
    %64 = vector.extract_strided_slice %16 {offsets = [0, 0], sizes = [4, 128], strides = [1, 1]} : vector<4x256xf32> to vector<4x128xf32>
    %65 = vector.broadcast %63 : vector<1x128xf32> to vector<4x128xf32>
    %66 = arith.mulf %65, %64 : vector<4x128xf32>
    %67 = arith.addf %62, %66 : vector<4x128xf32>
    %68 = arith.mulf %58, %61 : vector<1x128xf32>
    %69 = vector.extract_strided_slice %16 {offsets = [0, 128], sizes = [4, 128], strides = [1, 1]} : vector<4x256xf32> to vector<4x128xf32>
    %70 = vector.broadcast %68 : vector<1x128xf32> to vector<4x128xf32>
    %71 = arith.mulf %70, %69 : vector<4x128xf32>
    %72 = arith.addf %67, %71 : vector<4x128xf32>
    %73 = tpu.concatenate %44, %72 in 1 : vector<4x128xf32>, vector<4x128xf32> -> vector<4x256xf32>
    %cst_21 = arith.constant dense<0.000000e+00> : vector<4x256xf32>
    %74 = tpu.matmul %2, %73, %cst_21 {dimension_numbers = #tpu.dot_dimension_numbers<[1], [0], [0], [1], [0, 0, 1, 1], [], []>} : vector<4x4xf32>, vector<4x256xf32>, vector<4x256xf32> -> vector<4x256xf32>
    %75 = vector.broadcast %3 : vector<4x1xf32> to vector<4x256xf32>
    %76 = arith.addf %74, %75 : vector<4x256xf32>
    %77 = vector.extract_strided_slice %76 {offsets = [0, 0], sizes = [4, 128], strides = [1, 1]} : vector<4x256xf32> to vector<4x128xf32>
    %c0_22 = arith.constant 0 : index
    %c0_23 = arith.constant 0 : index
    %c0_24 = arith.constant 0 : index
    %78 = vector.load %arg6[%c0_22, %c0_23, %c0_24] : memref<2x4x128xf32, #tpu.memory_space<vmem>>, vector<1x4x128xf32>
    %79 = vector.shape_cast %78 : vector<1x4x128xf32> to vector<4x128xf32>
    %80 = vector.shape_cast %77 : vector<4x128xf32> to vector<1x4x128xf32>
    tpu.vector_store %arg6[%c0_22, %c0_23, %c0_24], %80 {strides = array<i32>} : memref<2x4x128xf32, #tpu.memory_space<vmem>>, vector<1x4x128xf32>,
    %81 = vector.extract_strided_slice %76 {offsets = [0, 128], sizes = [4, 128], strides = [1, 1]} : vector<4x256xf32> to vector<4x128xf32>
    %c1_25 = arith.constant 1 : index
    %c0_26 = arith.constant 0 : index
    %c0_27 = arith.constant 0 : index
    %82 = vector.load %arg6[%c1_25, %c0_26, %c0_27] : memref<2x4x128xf32, #tpu.memory_space<vmem>>, vector<1x4x128xf32>
    %83 = vector.shape_cast %82 : vector<1x4x128xf32> to vector<4x128xf32>
    %84 = vector.shape_cast %81 : vector<4x128xf32> to vector<1x4x128xf32>
    tpu.vector_store %arg6[%c1_25, %c0_26, %c0_27], %84 {strides = array<i32>} : memref<2x4x128xf32, #tpu.memory_space<vmem>>, vector<1x4x128xf32>,
    return
  }
  func.func @transform_0(%arg0: i32) -> (i32, i32, i32) {
    %c0_i32 = arith.constant 0 : i32
    %c0_i32_0 = arith.constant 0 : i32
    %c0_i32_1 = arith.constant 0 : i32
    return %c0_i32, %c0_i32_0, %arg0 : i32, i32, i32
  }
  func.func @transform_1(%arg0: i32) -> (i32, i32) {
    %c0_i32 = arith.constant 0 : i32
    %c0_i32_0 = arith.constant 0 : i32
    %c0_i32_1 = arith.constant 0 : i32
    return %c0_i32, %c0_i32_0 : i32, i32
  }
  func.func @transform_2(%arg0: i32) -> (i32, i32) {
    %c0_i32 = arith.constant 0 : i32
    %c0_i32_0 = arith.constant 0 : i32
    %c0_i32_1 = arith.constant 0 : i32
    return %c0_i32, %c0_i32_0 : i32, i32
  }
  func.func @transform_3(%arg0: i32) -> (i32, i32) {
    %c0_i32 = arith.constant 0 : i32
    %c0_i32_0 = arith.constant 0 : i32
    %c0_i32_1 = arith.constant 0 : i32
    return %c0_i32, %c0_i32_0 : i32, i32
  }
  func.func @transform_4(%arg0: i32) -> (i32, i32) {
    %c0_i32 = arith.constant 0 : i32
    %c0_i32_0 = arith.constant 0 : i32
    %c0_i32_1 = arith.constant 0 : i32
    return %c0_i32, %c0_i32_0 : i32, i32
  }
  func.func @transform_5(%arg0: i32) -> (i32, i32, i32) {
    %c0_i32 = arith.constant 0 : i32
    %c0_i32_0 = arith.constant 0 : i32
    %c0_i32_1 = arith.constant 0 : i32
    return %c0_i32, %c0_i32_0, %arg0 : i32, i32, i32
  }
}

</mosaic_0001>

<llo_original>
// kernel: tpu_custom_call.1
$region0: #{tpu_custom_call.1}
  #allocation0 [shape = 'u32[]', space=smem, size = 0x4, offset = 0x4, fixed_abs, tag = 'smem constant byte address 0x4 - core index']
  #allocation1 [shape = 'u32[144,128]{1,0:T(1,128)}', space=vmem, size = 0x12000, scoped, tag = 'internal scratch']
  %s0 = inlined_call_operand.vmem [shape: f32[2,4,256], index: 0, kind: input, shape index: {}]
  %s1 = inlined_call_operand.vmem [shape: f32[12,4], index: 1, kind: input, shape index: {}]
  %s2 = inlined_call_operand.vmem [shape: f32[12,1], index: 2, kind: input, shape index: {}]
  %s3 = inlined_call_operand.vmem [shape: f32[4,4], index: 3, kind: input, shape index: {}]
  %s4 = inlined_call_operand.vmem [shape: f32[4,1], index: 4, kind: input, shape index: {}]
  %s5 = inlined_call_operand.hbm [shape: f32[2,4,256], index: 5, kind: output, shape index: {}]
  %s6 = sld [smem:[#allocation0]]
  $region94: #{tpu_custom_call.1} parent=0
    _
  %s8 = ssub.s32 1, %s6
  %s9 = scalar_select 0, %s8, %s6
  $region1: #{tpu_custom_call.1} parent=0
    #allocation2 [shape = 'u8[8192]{0}', space=vmem, size = 0x2000, scoped, tag = 'input window, operand 0']
    #allocation3 [shape = 'u8[8192]{0}', space=vmem, size = 0x2000, scoped, tag = 'output window, operand 0']
    #allocation4 [shape = 's32[2]{0}', space=sflag, size = 0x8, scoped, tag = 'scoped memory for tpu_custom_call.1']
    %10 = vsyncpa [#allocation4], 0
    %s11 = scalar_lea.sflag [#allocation4], 1
    %12 = vsyncpa %s11, 0
    loop: start=0, step=1, limit=4
    $region2: #{tpu_custom_call.1} parent=1 // loop_pre_header
      _
    $region3: #{tpu_custom_call.1} parent=1 // loop_header
      %s14 = sphi 0, %s18
      %p15 = scmp.ge.s32.totalorder %s14, 4
      %s24 = sphi 0, %s26
      %s27 = sphi 0, %s24
      %s28 = sphi 0, %s27
      %s44 = sphi 0, %s28
      %s48 = sphi 0, %s48
      %s50 = sphi 0, %s48
      %s51 = sphi 0, %s50
      %s65 = sphi 0, %s51
      %s69 = sphi 0, %s69
      %s71 = sphi 0, %s69
      %s72 = sphi 0, %s71
      %s86 = sphi 0, %s72
      %s90 = sphi 0, %s90
      %s92 = sphi 0, %s90
      %s93 = sphi 0, %s92
      %s107 = sphi 0, %s93
      %s111 = sphi 0, %s111
      %s113 = sphi 0, %s111
      %s114 = sphi 0, %s113
      %s128 = sphi 0, %s114
      %s134 = sphi 0, %s136
      %s137 = sphi 0, %s134
      %s138 = sphi 0, %s137
      %s154 = sphi 0, %s138
    $region4: #{tpu_custom_call.1} parent=1 // loop_header_branch
      %17 = sbr.rel (%p15) target = $region8
    $region5: #{tpu_custom_call.1} parent=1 // loop_body
      %s19 = ssub.s32 %s14, 1
      %s20 = ssub.s32 %s14, 2
      %s21 = sadd.s32 %s14, 1
      %s22 = ssub.s32 %s14, %s21
      %p23 = scmp.eq.s32.totalorder %s22, 0
      %s25 = sadd.s32 %s24, 1
      %s26 = scalar_select %p23, %s24, %s25
      %p29 = pneg %p23
      %p30 = scmp.eq.s32.totalorder %s14, 1
      %p31 = por %p29, %p30
      %p32 = scmp.ne.s32.totalorder %s24, %s27
      %p33 = scmp.eq.s32.totalorder %s14, 0
      %p34 = por %p32, %p33
      %p35 = scmp.ne.s32.totalorder %s24, %s27
      %p36 = scmp.eq.s32.totalorder %s19, 1
      %p37 = por %p35, %p36
      %p38 = scmp.ne.s32.totalorder %s27, %s28
      %p39 = scmp.eq.s32.totalorder %s19, 0
      %p40 = por %p38, %p39
      %p41 = scmp.ne.s32.totalorder %s27, %s28
      %p42 = scmp.eq.s32.totalorder %s20, 1
      %p43 = por %p41, %p42
      %p45 = scmp.ne.s32.totalorder %s28, %s44
      %p46 = scmp.eq.s32.totalorder %s20, 0
      %p47 = por %p45, %p46
      %s49 = sadd.s32 %s48, 1
      %p52 = scmp.eq.s32.totalorder %s14, 1
      %p53 = scmp.ne.s32.totalorder %s48, %s50
      %p54 = scmp.eq.s32.totalorder %s14, 0
      %p55 = por %p53, %p54
      %p56 = scmp.ne.s32.totalorder %s48, %s50
      %p57 = scmp.eq.s32.totalorder %s19, 1
      %p58 = por %p56, %p57
      %p59 = scmp.ne.s32.totalorder %s50, %s51
      %p60 = scmp.eq.s32.totalorder %s19, 0
      %p61 = por %p59, %p60
      %p62 = scmp.ne.s32.totalorder %s50, %s51
      %p63 = scmp.eq.s32.totalorder %s20, 1
      %p64 = por %p62, %p63
      %p66 = scmp.ne.s32.totalorder %s51, %s65
      %p67 = scmp.eq.s32.totalorder %s20, 0
      %p68 = por %p66, %p67
      %s70 = sadd.s32 %s69, 1
      %p73 = scmp.eq.s32.totalorder %s14, 1
      %p74 = scmp.ne.s32.totalorder %s69, %s71
      %p75 = scmp.eq.s32.totalorder %s14, 0
      %p76 = por %p74, %p75
      %p77 = scmp.ne.s32.totalorder %s69, %s71
      %p78 = scmp.eq.s32.totalorder %s19, 1
      %p79 = por %p77, %p78
      %p80 = scmp.ne.s32.totalorder %s71, %s72
      %p81 = scmp.eq.s32.totalorder %s19, 0
      %p82 = por %p80, %p81
      %p83 = scmp.ne.s32.totalorder %s71, %s72
      %p84 = scmp.eq.s32.totalorder %s20, 1
      %p85 = por %p83, %p84
      %p87 = scmp.ne.s32.totalorder %s72, %s86
      %p88 = scmp.eq.s32.totalorder %s20, 0
      %p89 = por %p87, %p88
      %s91 = sadd.s32 %s90, 1
      %p94 = scmp.eq.s32.totalorder %s14, 1
      %p95 = scmp.ne.s32.totalorder %s90, %s92
      %p96 = scmp.eq.s32.totalorder %s14, 0
      %p97 = por %p95, %p96
      %p98 = scmp.ne.s32.totalorder %s90, %s92
      %p99 = scmp.eq.s32.totalorder %s19, 1
      %p100 = por %p98, %p99
      %p101 = scmp.ne.s32.totalorder %s92, %s93
      %p102 = scmp.eq.s32.totalorder %s19, 0
      %p103 = por %p101, %p102
      %p104 = scmp.ne.s32.totalorder %s92, %s93
      %p105 = scmp.eq.s32.totalorder %s20, 1
      %p106 = por %p104, %p105
      %p108 = scmp.ne.s32.totalorder %s93, %s107
      %p109 = scmp.eq.s32.totalorder %s20, 0
      %p110 = por %p108, %p109
      %s112 = sadd.s32 %s111, 1
      %p115 = scmp.eq.s32.totalorder %s14, 1
      %p116 = scmp.ne.s32.totalorder %s111, %s113
      %p117 = scmp.eq.s32.totalorder %s14, 0
      %p118 = por %p116, %p117
      %p119 = scmp.ne.s32.totalorder %s111, %s113
      %p120 = scmp.eq.s32.totalorder %s19, 1
      %p121 = por %p119, %p120
      %p122 = scmp.ne.s32.totalorder %s113, %s114
      %p123 = scmp.eq.s32.totalorder %s19, 0
      %p124 = por %p122, %p123
      %p125 = scmp.ne.s32.totalorder %s113, %s114
      %p126 = scmp.eq.s32.totalorder %s20, 1
      %p127 = por %p125, %p126
      %p129 = scmp.ne.s32.totalorder %s114, %s128
      %p130 = scmp.eq.s32.totalorder %s20, 0
      %p131 = por %p129, %p130
      %s132 = ssub.s32 %s14, %s21
      %p133 = scmp.eq.s32.totalorder %s132, 0
      %s135 = sadd.s32 %s134, 1
      %s136 = scalar_select %p133, %s134, %s135
      %p139 = pneg %p133
      %p140 = scmp.eq.s32.totalorder %s14, 1
      %p141 = por %p139, %p140
      %p142 = scmp.ne.s32.totalorder %s134, %s137
      %p143 = scmp.eq.s32.totalorder %s14, 0
      %p144 = por %p142, %p143
      %p145 = scmp.ne.s32.totalorder %s134, %s137
      %p146 = scmp.eq.s32.totalorder %s19, 1
      %p147 = por %p145, %p146
      %p148 = scmp.ne.s32.totalorder %s137, %s138
      %p149 = scmp.eq.s32.totalorder %s19, 0
      %p150 = por %p148, %p149
      %p151 = scmp.ne.s32.totalorder %s137, %s138
      %p152 = scmp.eq.s32.totalorder %s20, 1
      %p153 = por %p151, %p152
      %p155 = scmp.ne.s32.totalorder %s138, %s154
      %p156 = scmp.eq.s32.totalorder %s20, 0
      %p157 = por %p155, %p156
      %p158 = scmp.le.s32.totalorder 1, %s14
      %p159 = scmp.lt.s32.totalorder %s14, 3
      %p160 = pnand %p158, %p159
      %p161 = pneg %p160
      // Predicated region
      $region9: #{tpu_custom_call.1} parent=5 // pred_check
        _
      $region10: #{tpu_custom_call.1} parent=5 // pred_check_branch
        %163 = sbr.rel (%p160) target = $region12
      $region11: #{tpu_custom_call.1} parent=5 // pred_region
        %s164 = ssub.s32 %s14, 1
        // Predicated region
        $region13: #{tpu_custom_call.1} parent=11 // pred_check
          %p165 = pneg %p61
        $region14: #{tpu_custom_call.1} parent=11 // pred_check_branch
          %167 = sbr.rel (%p165) target = $region16
        $region15: #{tpu_custom_call.1} parent=11 // pred_region
          _
        $region16: #{tpu_custom_call.1} parent=11 // pred_fallthru
          _
        // Predicated region
        $region17: #{tpu_custom_call.1} parent=11 // pred_check
          %p168 = pneg %p82
        $region18: #{tpu_custom_call.1} parent=11 // pred_check_branch
          %170 = sbr.rel (%p168) target = $region20
        $region19: #{tpu_custom_call.1} parent=11 // pred_region
          _
        $region20: #{tpu_custom_call.1} parent=11 // pred_fallthru
          _
        // Predicated region
        $region21: #{tpu_custom_call.1} parent=11 // pred_check
          %p171 = pneg %p103
        $region22: #{tpu_custom_call.1} parent=11 // pred_check_branch
          %173 = sbr.rel (%p171) target = $region24
        $region23: #{tpu_custom_call.1} parent=11 // pred_region
          _
        $region24: #{tpu_custom_call.1} parent=11 // pred_fallthru
          _
        // Predicated region
        $region25: #{tpu_custom_call.1} parent=11 // pred_check
          %p174 = pneg %p124
        $region26: #{tpu_custom_call.1} parent=11 // pred_check_branch
          %176 = sbr.rel (%p174) target = $region28
        $region27: #{tpu_custom_call.1} parent=11 // pred_region
          _
        $region28: #{tpu_custom_call.1} parent=11 // pred_fallthru
          _
      $region12: #{tpu_custom_call.1} parent=5 // pred_fallthru
        _
      %p177 = scmp.lt.s32.totalorder %s14, 2
      // Predicated region
      $region29: #{tpu_custom_call.1} parent=5 // pred_check
        %p178 = pneg %p177
      $region30: #{tpu_custom_call.1} parent=5 // pred_check_branch
        %180 = sbr.rel (%p178) target = $region32
      $region31: #{tpu_custom_call.1} parent=5 // pred_region
        // Predicated region
        $region33: #{tpu_custom_call.1} parent=31 // pred_check
          %p181 = pneg %p34
        $region34: #{tpu_custom_call.1} parent=31 // pred_check_branch
          %183 = sbr.rel (%p181) target = $region36
        $region35: #{tpu_custom_call.1} parent=31 // pred_region
          %s184 = sand.u32 %s24, 1
          %s185 = sand.u32 %s24, 1
          %s186 = smul.addr %s185, 8
          %s187 = scalar_lea.vmem [#allocation2], %s186
          %s188 = smul.addr %s14, 4
          %s189 = scalar_lea.vmem %s0, %s188
          // Predicated region
          $region37: #{tpu_custom_call.1} parent=35 // pred_check
            _
          $region38: #{tpu_custom_call.1} parent=35 // pred_check_branch
            %191 = sbr.rel (0) target = $region40
          $region39: #{tpu_custom_call.1} parent=35 // pred_region
            // Predicated region
            $region41: #{tpu_custom_call.1} parent=39 // pred_check
              _
            $region42: #{tpu_custom_call.1} parent=39 // pred_check_branch
              %193 = sbr.rel target = $region44
            $region43: #{tpu_custom_call.1} parent=39 // pred_region
              // Predicated region
              $region56: #{tpu_custom_call.1} parent=43 // pred_check
                _
              $region57: #{tpu_custom_call.1} parent=43 // pred_check_branch
                %210 = sbr.rel (0) target = $region59
              $region58: #{tpu_custom_call.1} parent=43 // pred_region
                loop: start=0, step=1, limit=1
                $region60: #{tpu_custom_call.1} parent=58 // loop_pre_header
                  _
                $region61: #{tpu_custom_call.1} parent=58 // loop_header
                  %s212 = sphi 0, %s216
                  %p213 = scmp.ge.s32.totalorder %s212, 1
                  %s217 = sphi %s189, %s189
                  %s218 = sphi %s187, %s187
                $region62: #{tpu_custom_call.1} parent=58 // loop_header_branch
                  %215 = sbr.rel (%p213) target = $region66
                $region63: #{tpu_custom_call.1} parent=58 // loop_body
                  _
                $region64: #{tpu_custom_call.1} parent=58 // loop_footer
                  %s216 = sadd.s32 1, %s212
                $region65: #{tpu_custom_call.1} parent=58 // loop_footer_branch
                  %211 = sbr.rel target = $region61
                $region66: #{tpu_custom_call.1} parent=58 // loop_exit
                  _
                loop: start=0, step=1, limit=1
                $region67: #{tpu_custom_call.1} parent=58 // loop_pre_header
                  _
                $region68: #{tpu_custom_call.1} parent=58 // loop_header
                  %s221 = sphi 0, %s225
                  %p222 = scmp.ge.s32.totalorder %s221, 1
                  %s226 = sphi %s189, %s189
                  %s227 = sphi %s187, %s187
                $region69: #{tpu_custom_call.1} parent=58 // loop_header_branch
                  %224 = sbr.rel (%p222) target = $region73
                $region70: #{tpu_custom_call.1} parent=58 // loop_body
                  %v228 = vld [vmem:[%s226] sm:$0xf]
                  %229 = vst [vmem:[%s227] sm:$0xf] %v228
                  %v230 = vld [vmem:[%s226 + $0x8] sm:$0xf]
                  %231 = vst [vmem:[%s227 + $0x4] sm:$0xf] %v230
                $region71: #{tpu_custom_call.1} parent=58 // loop_footer
                  %s225 = sadd.s32 1, %s221
                $region72: #{tpu_custom_call.1} parent=58 // loop_footer_branch
                  %220 = sbr.rel target = $region68
                $region73: #{tpu_custom_call.1} parent=58 // loop_exit
                  _
              $region59: #{tpu_custom_call.1} parent=43 // pred_fallthru
                _
            $region44: #{tpu_custom_call.1} parent=39 // pred_fallthru
              _
            // Predicated region
            $region45: #{tpu_custom_call.1} parent=39 // pred_check
              _
            $region46: #{tpu_custom_call.1} parent=39 // pred_check_branch
              %195 = sbr.rel (0) target = $region48
            $region47: #{tpu_custom_call.1} parent=39 // pred_region
              loop: start=0, step=1, limit=1
              $region49: #{tpu_custom_call.1} parent=47 // loop_pre_header
                _
              $region50: #{tpu_custom_call.1} parent=47 // loop_header
                %s198 = sphi 0, %s202
                %p199 = scmp.ge.s32.totalorder %s198, 1
                %s203 = sphi %s189, %s189
                %s204 = sphi %s187, %s187
              $region51: #{tpu_custom_call.1} parent=47 // loop_header_branch
                %201 = sbr.rel (%p199) target = $region55
              $region52: #{tpu_custom_call.1} parent=47 // loop_body
                %v205 = vld [vmem:[%s203] sm:$0xf]
                %206 = vst [vmem:[%s204] sm:$0xf] %v205
                %v207 = vld [vmem:[%s203 + $0x8] sm:$0xf]
                %208 = vst [vmem:[%s204 + $0x4] sm:$0xf] %v207
              $region53: #{tpu_custom_call.1} parent=47 // loop_footer
                %s202 = sadd.s32 1, %s198
              $region54: #{tpu_custom_call.1} parent=47 // loop_footer_branch
                %197 = sbr.rel target = $region50
              $region55: #{tpu_custom_call.1} parent=47 // loop_exit
                _
            $region48: #{tpu_custom_call.1} parent=39 // pred_fallthru
              _
          $region40: #{tpu_custom_call.1} parent=35 // pred_fallthru
            _
          %232 = vnop
        $region36: #{tpu_custom_call.1} parent=31 // pred_fallthru
          _
      $region32: #{tpu_custom_call.1} parent=5 // pred_fallthru
        _
      %p233 = scmp.le.s32.totalorder 1, %s14
      %p234 = scmp.lt.s32.totalorder %s14, 3
      %p235 = pnand %p233, %p234
      %p236 = pneg %p235
      // Predicated region
      $region74: #{tpu_custom_call.1} parent=5 // pred_check
        _
      $region75: #{tpu_custom_call.1} parent=5 // pred_check_branch
        %238 = sbr.rel (%p235) target = $region77
      $region76: #{tpu_custom_call.1} parent=5 // pred_region
        %s239 = ssub.s32 %s14, 1
        %s240 = sand.u32 %s27, 1
        %s241 = sand.u32 %s27, 1
        %s242 = smul.addr %s241, 8
        %s243 = scalar_lea.vmem [#allocation2], %s242
        // Predicated region
        $region78: #{tpu_custom_call.1} parent=76 // pred_check
          %p244 = pneg %p40
        $region79: #{tpu_custom_call.1} parent=76 // pred_check_branch
          %246 = sbr.rel (%p244) target = $region81
        $region80: #{tpu_custom_call.1} parent=76 // pred_region
          _
        $region81: #{tpu_custom_call.1} parent=76 // pred_fallthru
          _
        %s247 = sand.u32 %s27, 1
        %s248 = sand.u32 %s27, 1
        %s249 = smul.addr %s248, 8
        %s250 = scalar_lea.vmem [#allocation2], %s249
        %p251 = pneg %p40
        %p252 = pneg %p37
        %p253 = pneg %p61
        %p254 = pneg %p58
        %p255 = pneg %p82
        %p256 = pneg %p79
        %p257 = pneg %p103
        %p258 = pneg %p100
        %p259 = pneg %p124
        %p260 = pneg %p121
        %p261 = pneg %p150
        %p262 = pneg %p147
        %s263 = sand.u32 %s137, 1
        %s264 = scalar_lea.sflag [#allocation4], %s263
        %s265 = sand.u32 %s137, 1
        %s266 = smul.addr %s265, 8
        %s267 = scalar_lea.vmem [#allocation3], %s266
        %v268 = vld [vmem:[%s1] sm:$0xff]
        %v269 = vld [vmem:[%s1 + $0x8] sm:$0xf]
        %v270 = vld [vmem:[%s2] sm:$0xff]
        %v271 = vld [vmem:[%s2 + $0x8] sm:$0xf]
        %v272 = vld [vmem:[%s3] sm:$0xf]
        %v273 = vld [vmem:[%s4] sm:$0xf]
        %v274 = vld [vmem:[%s243] sm:$0xf]
        %s275 = scalar_lea.vmem %s243, 4 [#allocation2]
        %v276 = vld [vmem:[%s275] sm:$0xf]
        %278 = vset.pattern.permute.xlu0 0
        %279 = vperm.xlu0 %278, %v270
        %v280 = vpop.permute.xlu0 %279
        %283 = vset.pattern.permute.xlu0 0
        %284 = vperm.xlu0 %283, %v271
        %v285 = vpop.permute.xlu0 %284
        %vm287 = vcmask 31744
        %v289 = vsel %vm287, %v268, 0
        %v292 = vsel %vm287, %v269, 0
        %vm294 = vcmask 1043456
        %v296 = vsel %vm294, %v274, 0
        %v299 = vsel %vm294, %v276, 0
        %301 = vmatprep.subr.mxu0 %v299
        %302 = vmatpush1.msra.mxu0 %v296
        %303 = vmatprep.subr.mxu0 0.0
        %304 = vmatpush1.msra.mxu0 0.0
        %305 = vmatprep.subr.mxu0 0.0
        %306 = vmatpush1.msra.mxu0 0.0
        %307 = vmatprep.subr.mxu0 0.0
        %308 = vmatpush1.msra.mxu0 0.0
        %309 = vmatprep.subr.mxu0 0.0
        %310 = vmatpush1.msra.mxu0 0.0
        %311 = vmatprep.subr.mxu0 0.0
        %312 = vmatpush1.msra.mxu0 0.0
        %313 = vmatprep.subr.mxu0 0.0
        %314 = vmatpush1.msra.mxu0 0.0
        %315 = vmatprep.subr.mxu0 0.0
        %316 = vmatpush1.msra.mxu0 0.0
        %317 = vmatprep.subr.mxu0 0.0
        %318 = vmatpush1.msra.mxu0 0.0
        %319 = vmatprep.subr.mxu0 0.0
        %320 = vmatpush1.msra.mxu0 0.0
        %321 = vmatprep.subr.mxu0 0.0
        %322 = vmatpush1.msra.mxu0 0.0
        %323 = vmatprep.subr.mxu0 0.0
        %324 = vmatpush1.msra.mxu0 0.0
        %325 = vmatprep.subr.mxu0 0.0
        %326 = vmatpush1.msra.mxu0 0.0
        %327 = vmatprep.subr.mxu0 0.0
        %328 = vmatpush1.msra.mxu0 0.0
        %329 = vmatprep.subr.mxu0 0.0
        %330 = vmatpush1.msra.mxu0 0.0
        %331 = vmatprep.subr.mxu0 0.0
        %332 = vmatpush1.msra.mxu0 0.0
        %333 = vmatprep.subr.mxu0 0.0
        %334 = vmatpush1.msra.mxu0 0.0
        %335 = vmatprep.subr.mxu0 0.0
        %336 = vmatpush1.msra.mxu0 0.0
        %337 = vmatprep.subr.mxu0 0.0
        %338 = vmatpush1.msra.mxu0 0.0
        %339 = vmatprep.subr.mxu0 0.0
        %340 = vmatpush1.msra.mxu0 0.0
        %341 = vmatprep.subr.mxu0 0.0
        %342 = vmatpush1.msra.mxu0 0.0
        %343 = vmatprep.subr.mxu0 0.0
        %344 = vmatpush1.msra.mxu0 0.0
        %345 = vmatprep.subr.mxu0 0.0
        %346 = vmatpush1.msra.mxu0 0.0
        %347 = vmatprep.subr.mxu0 0.0
        %348 = vmatpush1.msra.mxu0 0.0
        %349 = vmatprep.subr.mxu0 0.0
        %350 = vmatpush1.msra.mxu0 0.0
        %351 = vmatprep.subr.mxu0 0.0
        %352 = vmatpush1.msra.mxu0 0.0
        %353 = vmatprep.subr.mxu0 0.0
        %354 = vmatpush1.msra.mxu0 0.0
        %355 = vmatprep.subr.mxu0 0.0
        %356 = vmatpush1.msra.mxu0 0.0
        %357 = vmatprep.subr.mxu0 0.0
        %358 = vmatpush1.msra.mxu0 0.0
        %359 = vmatprep.subr.mxu0 0.0
        %360 = vmatpush1.msra.mxu0 0.0
        %361 = vmatprep.subr.mxu0 0.0
        %362 = vmatpush1.msra.mxu0 0.0
        %363 = vmatprep.subr.mxu0 0.0
        %364 = vmatpush1.msra.mxu0 0.0
        %365 = vmatprep.mubr.f32.mxu0 0.0
        %366 = vmatmul.mubr.f32.gmra.mrb[0].mxu0 %v289
        %v367 = vpop.f32.mrb[0].mxu0
        %v368 = vadd.f32 %v280, %v367
        %v369 = vpop.f32.mrb[0].mxu0
        %v370 = vadd.f32 %v280, %v369
        %371 = vmatprep.mubr.f32.mxu0 0.0
        %372 = vmatmul.mubr.f32.gmra.mrb[0].mxu0 %v292
        %v373 = vpop.f32.mrb[0].mxu0
        %v374 = vadd.f32 %v285, %v373
        %v375 = vpop.f32.mrb[0].mxu0
        %v376 = vadd.f32 %v285, %v375
        %377 = vdwg.mxu0
        %v378 = vmul.f32 %v368, 0.5
        %v379 = vmul.f32 %v370, 0.5
        %v381 = vrot.slane %v368, 4
        %v383 = vmul.f32 %v378, %v381
        %v384 = vsel %vm294, %v383, 0.0
        %v385 = vrot.slane %v384, 4
        %v386 = vadd.f32 %v384, %v385
        %v387 = vrot.slane %v386, 2
        %v388 = vadd.f32 %v386, %v387
        %v389 = vrot.slane %v388, 1
        %v390 = vadd.f32 %v388, %v389
        %v392 = vrot.slane %v370, 4
        %v394 = vmul.f32 %v378, %v392
        %v395 = vsel %vm294, %v394, 0.0
        %v396 = vrot.slane %v395, 4
        %v397 = vadd.f32 %v395, %v396
        %v398 = vrot.slane %v397, 2
        %v399 = vadd.f32 %v397, %v398
        %v400 = vrot.slane %v399, 1
        %v401 = vadd.f32 %v399, %v400
        %v402 = vmax.f32 %v390, %v401
        %v403 = vsub.f32 %v390, %v402
        %v404 = vmul.f32 %v403, 1.442695
        %v405 = vpow.pop %v404
        %v406 = vsub.f32 %v401, %v402
        %v407 = vmul.f32 %v406, 1.442695
        %v408 = vpow.pop %v407
        %v409 = vadd.f32 %v405, %v408
        %v410 = vrcp.pop %v409
        %v411 = vmul.f32 1.0, %v410
        %v412 = vmul.f32 %v405, %v411
        %v413 = vmul.f32 %v412, %v374
        %v414 = vadd.f32 %v413, 0.0
        %v415 = vmul.f32 %v408, %v411
        %v416 = vmul.f32 %v415, %v376
        %v417 = vadd.f32 %v414, %v416
        %v418 = vmul.f32 %v379, %v381
        %v419 = vsel %vm294, %v418, 0.0
        %v420 = vrot.slane %v419, 4
        %v421 = vadd.f32 %v419, %v420
        %v422 = vrot.slane %v421, 2
        %v423 = vadd.f32 %v421, %v422
        %v424 = vrot.slane %v423, 1
        %v425 = vadd.f32 %v423, %v424
        %v426 = vmul.f32 %v379, %v392
        %v427 = vsel %vm294, %v426, 0.0
        %v428 = vrot.slane %v427, 4
        %v429 = vadd.f32 %v427, %v428
        %v430 = vrot.slane %v429, 2
        %v431 = vadd.f32 %v429, %v430
        %v432 = vrot.slane %v431, 1
        %v433 = vadd.f32 %v431, %v432
        %v434 = vmax.f32 %v425, %v433
        %v435 = vsub.f32 %v425, %v434
        %v436 = vmul.f32 %v435, 1.442695
        %v437 = vpow.pop %v436
        %v438 = vsub.f32 %v433, %v434
        %v439 = vmul.f32 %v438, 1.442695
        %v440 = vpow.pop %v439
        %v441 = vadd.f32 %v437, %v440
        %v442 = vrcp.pop %v441
        %v443 = vmul.f32 1.0, %v442
        %v444 = vmul.f32 %v437, %v443
        %v445 = vmul.f32 %v444, %v374
        %v446 = vadd.f32 %v445, 0.0
        %v447 = vmul.f32 %v440, %v443
        %v448 = vmul.f32 %v447, %v376
        %v449 = vadd.f32 %v446, %v448
        %451 = vset.pattern.permute.xlu0 0
        %452 = vperm.xlu0 %451, %v273
        %v453 = vpop.permute.xlu0 %452
        %v456 = vsel %vm287, %v272, 0
        %v459 = vsel %vm294, %v417, 0
        %v462 = vsel %vm294, %v449, 0
        %464 = vmatprep.subr.mxu0 %v462
        %465 = vmatpush1.msra.mxu0 %v459
        %466 = vmatprep.subr.mxu0 0.0
        %467 = vmatpush1.msra.mxu0 0.0
        %468 = vmatprep.subr.mxu0 0.0
        %469 = vmatpush1.msra.mxu0 0.0
        %470 = vmatprep.subr.mxu0 0.0
        %471 = vmatpush1.msra.mxu0 0.0
        %472 = vmatprep.subr.mxu0 0.0
        %473 = vmatpush1.msra.mxu0 0.0
        %474 = vmatprep.subr.mxu0 0.0
        %475 = vmatpush1.msra.mxu0 0.0
        %476 = vmatprep.subr.mxu0 0.0
        %477 = vmatpush1.msra.mxu0 0.0
        %478 = vmatprep.subr.mxu0 0.0
        %479 = vmatpush1.msra.mxu0 0.0
        %480 = vmatprep.subr.mxu0 0.0
        %481 = vmatpush1.msra.mxu0 0.0
        %482 = vmatprep.subr.mxu0 0.0
        %483 = vmatpush1.msra.mxu0 0.0
        %484 = vmatprep.subr.mxu0 0.0
        %485 = vmatpush1.msra.mxu0 0.0
        %486 = vmatprep.subr.mxu0 0.0
        %487 = vmatpush1.msra.mxu0 0.0
        %488 = vmatprep.subr.mxu0 0.0
        %489 = vmatpush1.msra.mxu0 0.0
        %490 = vmatprep.subr.mxu0 0.0
        %491 = vmatpush1.msra.mxu0 0.0
        %492 = vmatprep.subr.mxu0 0.0
        %493 = vmatpush1.msra.mxu0 0.0
        %494 = vmatprep.subr.mxu0 0.0
        %495 = vmatpush1.msra.mxu0 0.0
        %496 = vmatprep.subr.mxu0 0.0
        %497 = vmatpush1.msra.mxu0 0.0
        %498 = vmatprep.subr.mxu0 0.0
        %499 = vmatpush1.msra.mxu0 0.0
        %500 = vmatprep.subr.mxu0 0.0
        %501 = vmatpush1.msra.mxu0 0.0
        %502 = vmatprep.subr.mxu0 0.0
        %503 = vmatpush1.msra.mxu0 0.0
        %504 = vmatprep.subr.mxu0 0.0
        %505 = vmatpush1.msra.mxu0 0.0
        %506 = vmatprep.subr.mxu0 0.0
        %507 = vmatpush1.msra.mxu0 0.0
        %508 = vmatprep.subr.mxu0 0.0
        %509 = vmatpush1.msra.mxu0 0.0
        %510 = vmatprep.subr.mxu0 0.0
        %511 = vmatpush1.msra.mxu0 0.0
        %512 = vmatprep.subr.mxu0 0.0
        %513 = vmatpush1.msra.mxu0 0.0
        %514 = vmatprep.subr.mxu0 0.0
        %515 = vmatpush1.msra.mxu0 0.0
        %516 = vmatprep.subr.mxu0 0.0
        %517 = vmatpush1.msra.mxu0 0.0
        %518 = vmatprep.subr.mxu0 0.0
        %519 = vmatpush1.msra.mxu0 0.0
        %520 = vmatprep.subr.mxu0 0.0
        %521 = vmatpush1.msra.mxu0 0.0
        %522 = vmatprep.subr.mxu0 0.0
        %523 = vmatpush1.msra.mxu0 0.0
        %524 = vmatprep.subr.mxu0 0.0
        %525 = vmatpush1.msra.mxu0 0.0
        %526 = vmatprep.subr.mxu0 0.0
        %527 = vmatpush1.msra.mxu0 0.0
        %528 = vmatprep.mubr.f32.mxu0 0.0
        %529 = vmatmul.mubr.f32.gmra.mrb[0].mxu0 %v456
        %v530 = vpop.f32.mrb[0].mxu0
        %v531 = vadd.f32 %v453, %v530
        %v532 = vpop.f32.mrb[0].mxu0
        %v533 = vadd.f32 %v453, %v532
        %534 = vdwg.mxu0
        %535 = vst [vmem:[%s267] sm:$0xf] %v531
        %s536 = scalar_lea.vmem %s267, 4 [#allocation3]
        %537 = vst [vmem:[%s536] sm:$0xf] %v533
        %s538 = sand.u32 %s137, 1
        %s539 = scalar_lea.sflag [#allocation4], %s538
        %s540 = sand.u32 %s137, 1
        %s541 = smul.addr %s540, 8
        %s542 = scalar_lea.vmem [#allocation3], %s541
        // Predicated region
        $region82: #{tpu_custom_call.1} parent=76 // pred_check
          %p543 = pneg %p147
        $region83: #{tpu_custom_call.1} parent=76 // pred_check_branch
          %545 = sbr.rel (%p543) target = $region85
        $region84: #{tpu_custom_call.1} parent=76 // pred_region
          %s547 = ssub.s32 128, 128
          %548 = vsyncadd %s539, %s547
          %s549 = smul.addr %s19, 64
          %s550 = scalar_lea.hbm %s5, %s549
          %s551 = sshll.u32 %s542, 4
          %s552 = int_to_ptr.vmem [resolvable:$true] %s551
          %557 = dma.vmem_to_hbm [thread:$0]  %s552, 128, %s550, %s539, 64, 128, 4
        $region85: #{tpu_custom_call.1} parent=76 // pred_fallthru
          _
      $region77: #{tpu_custom_call.1} parent=5 // pred_fallthru
        _
      %p558 = scmp.le.s32.totalorder 2, %s14
      // Predicated region
      $region86: #{tpu_custom_call.1} parent=5 // pred_check
        %p559 = pneg %p558
      $region87: #{tpu_custom_call.1} parent=5 // pred_check_branch
        %561 = sbr.rel (%p559) target = $region89
      $region88: #{tpu_custom_call.1} parent=5 // pred_region
        %s562 = ssub.s32 %s14, 2
        // Predicated region
        $region90: #{tpu_custom_call.1} parent=88 // pred_check
          %p563 = pneg %p153
        $region91: #{tpu_custom_call.1} parent=88 // pred_check_branch
          %565 = sbr.rel (%p563) target = $region93
        $region92: #{tpu_custom_call.1} parent=88 // pred_region
          %s566 = sand.u32 %s138, 1
          %s567 = scalar_lea.sflag [#allocation4], %s566
          %s568 = sand.u32 %s138, 1
          %s569 = smul.addr %s568, 8
          %s570 = scalar_lea.vmem [#allocation3], %s569
          %571 = dma.done %s567, 128
        $region93: #{tpu_custom_call.1} parent=88 // pred_fallthru
          _
      $region89: #{tpu_custom_call.1} parent=5 // pred_fallthru
        _
    $region6: #{tpu_custom_call.1} parent=1 // loop_footer
      %s18 = sadd.s32 1, %s14
    $region7: #{tpu_custom_call.1} parent=1 // loop_footer_branch
      %13 = sbr.rel target = $region3
    $region8: #{tpu_custom_call.1} parent=1 // loop_exit
      _
    %572 = vsyncpa [#allocation4], 1
    %s573 = scalar_lea.sflag [#allocation4], 1
    %574 = vsyncpa %s573, 1

</llo_original>
